<compile_context>
chip_gen: v5e
topology: v5e:2x2
jax: 0.10.0
libtpu: 0.0.40
codegen_flags: <defaults>
</compile_context>

<pallas_src>
import functools
import numpy as np
import jax
import jax.numpy as jnp
from jax.experimental import pallas as pl
from jax.experimental.pallas import tpu as pltpu

EPS = float(np.finfo(np.float32).eps)      # torch.finfo(torch.float).eps
INV_STD = 1.0 / (1.0 + EPS)                # cmvn=None -> mean=0.0, std=1.0


def _round_up(x, m):
    return ((x + m - 1) // m) * m


# ---------------------------------------------------------------------------
# Deterministic parameter construction (matches the torch module __init__)
# ---------------------------------------------------------------------------
def hamming_window_np(win_length):
    # torch.hamming_window(win_length): periodic=True, alpha=.54, beta=.46
    n = np.arange(win_length, dtype=np.float64)
    return (0.54 - 0.46 * np.cos(2.0 * np.pi * n / win_length)).astype(np.float32)


def get_mel_banks_np(num_mel_bins, num_fft_bins, sample_freq,
                     low_freq, high_freq, norm="slaney"):
    # non-VTLN branch of get_mel_banks; returns (n_mels, n_fft//2 + 1)
    all_freqs = np.linspace(0.0, sample_freq // 2, num_fft_bins // 2 + 1)
    m_min = 2595.0 * np.log10(1.0 + low_freq / 700.0)
    m_max = 2595.0 * np.log10(1.0 + high_freq / 700.0)
    m_pts = np.linspace(m_min, m_max, num_mel_bins + 2)
    f_pts = 700.0 * (10.0 ** (m_pts / 2595.0) - 1.0)
    f_diff = f_pts[1:] - f_pts[:-1]
    slopes = f_pts[None, :] - all_freqs[:, None]
    down_slopes = -1.0 * slopes[:, :-2] / f_diff[:-1]
    up_slopes = slopes[:, 2:] / f_diff[1:]
    fb = np.maximum(0.0, np.minimum(down_slopes, up_slopes))
    if norm is not None and norm == "slaney":
        enorm = 2.0 / (f_pts[2:num_mel_bins + 2] - f_pts[:num_mel_bins])
        fb = fb * enorm[None, :]
    return fb.T.astype(np.float32)


def windowed_dft_matrices_np(n_fft):
    # real/imag DFT bases with the hamming window folded in:
    #   real[f] =  sum_n w[n] x[n] cos(2*pi*f*n/N)
    #   imag[f] = -sum_n w[n] x[n] sin(2*pi*f*n/N)
    w = hamming_window_np(n_fft).astype(np.float64)
    n = np.arange(n_fft, dtype=np.float64)
    f = np.arange(n_fft // 2 + 1, dtype=np.float64)
    ang = 2.0 * np.pi * np.outer(n, f) / n_fft            # (n_fft, F)
    cos_m = (w[:, None] * np.cos(ang)).astype(np.float32)
    sin_m = (-w[:, None] * np.sin(ang)).astype(np.float32)
    return cos_m, sin_m


# ---------------------------------------------------------------------------
# Pallas kernel: windowed DFT -> power -> mel projection -> log compression
# ---------------------------------------------------------------------------
def fbank_kernel(frames_ref, dft_ref, melT_ref, out_ref, *, inv_n_fft, f_pad):
    # One wide MXU matmul for [re | im]; bf16 inputs, f32 accumulation.
    spec = jnp.dot(frames_ref[...], dft_ref[...],
                   preferred_element_type=jnp.float32)          # (tm, 2*f_pad)
    re = spec[:, :f_pad]                                        # 128-lane aligned
    im = spec[:, f_pad:]
    power = (re * re + im * im) * inv_n_fft                     # (tm, f_pad) f32
    # Cast power to the weight dtype so the mel matmul also runs at native
    # bf16 MXU rate (f32 accumulation keeps precision).
    mel = jnp.dot(power.astype(melT_ref.dtype), melT_ref[...],
                  preferred_element_type=jnp.float32)           # (tm, m_pad)
    # cmvn=None -> mean=0, std=1;  "/(1+eps)" folded into a multiply
    out_ref[...] = (20.0 * jnp.log10(mel + EPS)) * INV_STD
    # TODO(synk): output could be XLU-transposed in-kernel and stored (m_pad, tm)
    # to drop the wrapper transpose; low priority (~160 useful B/frame).


def _fbank_pallas(frames, dft_m, mel_t, *, n_fft, row_tile):
    """frames: (R, n_fft), R a multiple of row_tile (bf16 or f32).

    dft_m: (n_fft, 2*f_pad) windowed [cos|sin] (Nyquist bin dropped when its
           mel weight is zero, so no zero-padding columns feed the MXU).
    mel_t: (f_pad, m_pad)   mel_banks.T, zero-padded along the mel axis.
    Returns (R, m_pad) f32 log-mel features (mel padding sliced off by caller).
    """
    R = frames.shape[0]
    two_f_pad = dft_m.shape[1]
    f_pad = two_f_pad // 2
    m_pad = mel_t.shape[1]
    grid = (R // row_tile,)

    in_b = int(frames.dtype.itemsize)
    w_b = int(dft_m.dtype.itemsize)
    flops = 2 * R * n_fft * two_f_pad + 2 * R * f_pad * m_pad + 3 * R * f_pad
    transcendentals = R * m_pad
    bytes_accessed = (in_b * R * n_fft + 4 * R * m_pad
                      + w_b * (n_fft * two_f_pad + f_pad * m_pad))

    return pl.pallas_call(
        functools.partial(fbank_kernel, inv_n_fft=1.0 / n_fft, f_pad=f_pad),
        out_shape=jax.ShapeDtypeStruct((R, m_pad), jnp.float32),
        grid_spec=pltpu.PrefetchScalarGridSpec(
            num_scalar_prefetch=0,
            grid=grid,
            in_specs=[
                pl.BlockSpec((row_tile, n_fft), lambda i: (i, 0)),
                pl.BlockSpec((n_fft, two_f_pad), lambda i: (0, 0)),   # resident
                pl.BlockSpec((f_pad, m_pad), lambda i: (0, 0)),       # resident
            ],
            out_specs=pl.BlockSpec((row_tile, m_pad), lambda i: (i, 0)),
        ),
        compiler_params=pltpu.CompilerParams(
            dimension_semantics=("parallel",)),
        cost_estimate=pl.CostEstimate(
            flops=int(flops),
            transcendentals=int(transcendentals),
            bytes_accessed=int(bytes_accessed)),
    )(frames, dft_m, mel_t)


# ---------------------------------------------------------------------------
# FeatureExtractor (fbank) wrapper
# ---------------------------------------------------------------------------
class FeatureExtractorFbank:
    def __init__(self, n_fft=512, hop_length=160, win_type="hamming",
                 n_mels=40, sample_rate=16000, f_min=0.0, f_max=8000.0,
                 norm="slaney", preemphasis_coefficient=0.97,
                 row_tile=512, use_bf16_matmul=True):
        assert win_type == "hamming"
        assert row_tile % 16 == 0, "row_tile must be a multiple of 16 (bf16 tile)"
        self.n_fft = n_fft
        self.hop = hop_length
        self.n_mels = n_mels
        self.preemph = preemphasis_coefficient
        self.row_tile = row_tile
        self.use_bf16 = use_bf16_matmul
        self.compute_dtype = jnp.bfloat16 if use_bf16_matmul else jnp.float32
        self.output_size = n_mels

        n_freq = n_fft // 2 + 1
        mel = get_mel_banks_np(n_mels, n_fft, sample_rate, f_min, f_max, norm)

        # Nyquist-bin trim: for f_min=0 / f_max=sr/2 the Slaney filterbank puts
        # (numerically) zero weight on bin n_fft/2, so dropping it is equivalent
        # and keeps the frequency axis exactly 2 whole 128-lane vregs (256).
        nyquist_weight = float(np.max(np.abs(mel[:, -1])))
        if nyquist_weight < 1e-6 and (n_fft // 2) % 128 == 0:
            n_used = n_fft // 2                       # 257 -> 256 (drop Nyquist)
        else:
            n_used = n_freq                           # fall back: keep all bins
        self.n_used = n_used
        self.f_pad = _round_up(n_used, 128)           # 256 for the default config
        self.m_pad = _round_up(n_mels, 128)           # 40 -> 128 (lane-dense store)

        cos_m, sin_m = windowed_dft_matrices_np(n_fft)
        dft = np.zeros((n_fft, 2 * self.f_pad), dtype=np.float32)
        dft[:, :n_used] = cos_m[:, :n_used]
        dft[:, self.f_pad:self.f_pad + n_used] = sin_m[:, :n_used]
        self.dft_m = jnp.asarray(dft, dtype=self.compute_dtype)

        mel_t = np.zeros((self.f_pad, self.m_pad), dtype=np.float32)
        mel_t[:n_used, :n_mels] = mel.T[:n_used, :]
        self.mel_t = jnp.asarray(mel_t, dtype=self.compute_dtype)

    def __call__(self, x, length=None):
        if length is not None:
            # TODO(synk): torch returns int64; int32 here (jax x64 off by default)
            length = jnp.ceil(length / self.hop).astype(jnp.int32)

        squeeze = (x.ndim == 1)
        if squeeze:
            x = x[None, :]
        x = x.astype(jnp.float32)
        B, L = x.shape

        # pre-emphasis in f32, cast once to the matmul compute dtype (bf16):
        # halves framing HBM traffic and removes the in-kernel cast.
        emph = jnp.concatenate(
            [x[:, :1], x[:, 1:] - self.preemph * x[:, :-1]],
            axis=-1).astype(self.compute_dtype)

        # STFT framing/padding exactly as batch_short_time_fourier_transform
        if L % self.hop == 0:
            pad = (self.n_fft - self.hop, 0)
        else:
            pad = (self.n_fft - self.hop, self.hop - L % self.hop)
        padded = jnp.pad(emph, ((0, 0), pad))
        T = (padded.shape[1] - self.n_fft) // self.hop + 1
        # TODO(synk): framing is still a wrapper-side gather that writes a
        # (B*T, n_fft) matrix to HBM and re-reads it; for long audio move it
        # in-kernel (memory_space=pl.ANY waveform, DMA a contiguous
        # (row_tile-1)*hop + n_fft slab per grid step, assemble rows in VMEM
        # and fold pre-emphasis in).
        idx = jnp.arange(T)[:, None] * self.hop + jnp.arange(self.n_fft)[None, :]
        frames = padded[:, idx].reshape(B * T, self.n_fft)      # (B*T, n_fft)

        # MXU M-tile: large for long audio, capped so the grid keeps >=2 steps
        # when possible (both TensorCores on v7x), always a multiple of 16.
        R = B * T
        row_tile = min(self.row_tile, _round_up(max(1, (R + 3) // 4), 16))
        R_pad = _round_up(R, row_tile)
        if R_pad != R:
            frames = jnp.pad(frames, ((0, R_pad - R), (0, 0)))

        out = _fbank_pallas(frames, self.dft_m, self.mel_t,
                            n_fft=self.n_fft, row_tile=row_tile)  # (R_pad, m_pad)

        # drop row padding and mel-lane padding, go to PyTorch layout (B, M, T)
        fbank = out[:R, :self.n_mels].reshape(B, T, self.n_mels).transpose(0, 2, 1)
        if squeeze:
            fbank = fbank[0]
        return fbank, length


# TODO(synk): other extractor_type branches ('lps', 'mask', 'fbank_cnn',
# 'gray_crop_flip') and cmvn-file loading are not instantiated here; only the
# default 'fbank' path is implemented as the Pallas hot-path kernel.


if __name__ == "__main__":
    key = jax.random.PRNGKey(0)
    B, L = 2, 1600                      # 2 waves, 0.1 s @ 16 kHz -> 10 frames
    x = jax.random.normal(key, (B, L), dtype=jnp.float32)
    length = jnp.array([1600.0, 1200.0], dtype=jnp.float32)

    n_fft, hop, n_mels = 512, 160, 40
    T = L // hop
    idx = jnp.arange(T)[:, None] * hop + jnp.arange(n_fft)[None, :]
    emph = jnp.concatenate([x[:, :1], x[:, 1:] - 0.97 * x[:, :-1]], axis=-1)

    # ---- default path: bf16 MXU matmuls -----------------------------------
    extractor = FeatureExtractorFbank()
    fbank, new_len = extractor(x, length)
    fbank = jax.block_until_ready(fbank)
    assert fbank.shape == (B, n_mels, T), fbank.shape
    assert bool(jnp.all(jnp.isfinite(fbank)))
    assert int(new_len[0]) == 10 and int(new_len[1]) == 8, new_len

    # Structural check: pure-JAX reference using the SAME bf16-quantized
    # frames/weights (f32 accumulation), so only kernel plumbing (padding,
    # slicing, tiling, accumulation order) can differ -> tight tolerance.
    padded_q = jnp.pad(emph.astype(jnp.bfloat16), ((0, 0), (n_fft - hop, 0)))
    fr_q = padded_q[:, idx]                                        # (B,T,512) bf16
    spec_q = jnp.einsum("btn,nf->btf", fr_q, extractor.dft_m,
                        preferred_element_type=jnp.float32)
    fp = extractor.f_pad
    re_q, im_q = spec_q[..., :fp], spec_q[..., fp:]
    pow_q = (re_q * re_q + im_q * im_q) / n_fft
    mel_q = jnp.einsum("btf,fm->btm", pow_q.astype(jnp.bfloat16), extractor.mel_t,
                       preferred_element_type=jnp.float32)
    ref_q = ((20.0 * jnp.log10(mel_q + EPS)) * INV_STD)[..., :n_mels]
    ref_q = jnp.transpose(ref_q, (0, 2, 1))                        # (B, 40, T)
    err_struct = float(jnp.max(jnp.abs(fbank - ref_q)))
    assert err_struct < 0.05, err_struct

    # ---- exact-semantics path: f32 matmuls vs torch-faithful f32 reference --
    extractor_f32 = FeatureExtractorFbank(use_bf16_matmul=False)
    fbank32, _ = extractor_f32(x, length)
    fbank32 = jax.block_until_ready(fbank32)

    cos_np, sin_np = windowed_dft_matrices_np(n_fft)
    mel_np = get_mel_banks_np(n_mels, n_fft, 16000, 0.0, 8000.0, "slaney")
    padded32 = jnp.pad(emph, ((0, 0), (n_fft - hop, 0)))           # L % hop == 0
    fr32 = padded32[:, idx].astype(jnp.float32)                    # (B, T, 512)
    hi = jax.lax.Precision.HIGHEST
    re32 = jnp.einsum("btn,nf->btf", fr32, jnp.asarray(cos_np), precision=hi)
    im32 = jnp.einsum("btn,nf->btf", fr32, jnp.asarray(sin_np), precision=hi)
    pow32 = (re32 * re32 + im32 * im32) / float(n_fft)
    ref32 = 20.0 * jnp.log10(
        jnp.einsum("btf,mf->btm", pow32, jnp.asarray(mel_np), precision=hi)
        + EPS) / (1.0 + EPS)
    ref32 = jnp.transpose(ref32, (0, 2, 1))                        # (B, 40, T)
    err32 = float(jnp.max(jnp.abs(fbank32 - ref32)))
    assert err32 < 0.5, err32

    print("KERNEL_OK")
</pallas_src>

<mosaic_0001>
module attributes {stable_mosaic.version = 11 : i64} {
  func.func @fbank_kernel(%arg0: i32, %arg1: memref<16x512xbf16, #tpu.memory_space<vmem>>, %arg2: memref<512x512xbf16, #tpu.memory_space<vmem>>, %arg3: memref<256x128xbf16, #tpu.memory_space<vmem>>, %arg4: memref<16x128xf32, #tpu.memory_space<vmem>>) attributes {dimension_semantics = [#tpu.dimension_semantics<parallel>], iteration_bounds = array<i64: 2>, scalar_prefetch = 0 : i64, scratch_operands = 0 : i64, tpu.core_type = #tpu.core_type<tc>, window_params = [{transform_indices = @transform_0, window_bounds = array<i64: 16, 512>}, {pipeline_mode = #tpu.pipeline_mode<synchronous>, transform_indices = @transform_1, window_bounds = array<i64: 512, 512>}, {pipeline_mode = #tpu.pipeline_mode<synchronous>, transform_indices = @transform_2, window_bounds = array<i64: 256, 128>}, {transform_indices = @transform_3, window_bounds = array<i64: 16, 128>}]} {
    %c0 = arith.constant 0 : index
    %c0_0 = arith.constant 0 : index
    %0 = vector.load %arg1[%c0, %c0_0] : memref<16x512xbf16, #tpu.memory_space<vmem>>, vector<16x512xbf16>
    %c0_1 = arith.constant 0 : index
    %c0_2 = arith.constant 0 : index
    %1 = vector.load %arg2[%c0_1, %c0_2] : memref<512x512xbf16, #tpu.memory_space<vmem>>, vector<512x512xbf16>
    %cst = arith.constant dense<0.000000e+00> : vector<16x512xf32>
    %2 = tpu.matmul %0, %1, %cst {dimension_numbers = #tpu.dot_dimension_numbers<[1], [0], [0], [1], [0, 0, 1, 1], [], []>} : vector<16x512xbf16>, vector<512x512xbf16>, vector<16x512xf32> -> vector<16x512xf32>
    %3 = vector.extract_strided_slice %2 {offsets = [0, 0], sizes = [16, 256], strides = [1, 1]} : vector<16x512xf32> to vector<16x256xf32>
    %4 = vector.extract_strided_slice %2 {offsets = [0, 256], sizes = [16, 256], strides = [1, 1]} : vector<16x512xf32> to vector<16x256xf32>
    %5 = arith.mulf %3, %3 : vector<16x256xf32>
    %6 = arith.mulf %4, %4 : vector<16x256xf32>
    %7 = arith.addf %5, %6 : vector<16x256xf32>
    %cst_3 = arith.constant 0.001953125 : f32
    %8 = vector.broadcast %cst_3 : f32 to vector<16x256xf32>
    %9 = arith.mulf %7, %8 : vector<16x256xf32>
    %10 = arith.truncf %9 : vector<16x256xf32> to vector<16x256xbf16>
    %c0_4 = arith.constant 0 : index
    %c0_5 = arith.constant 0 : index
    %11 = vector.load %arg3[%c0_4, %c0_5] : memref<256x128xbf16, #tpu.memory_space<vmem>>, vector<256x128xbf16>
    %cst_6 = arith.constant dense<0.000000e+00> : vector<16x128xf32>
    %12 = tpu.matmul %10, %11, %cst_6 {dimension_numbers = #tpu.dot_dimension_numbers<[1], [0], [0], [1], [0, 0, 1, 1], [], []>} : vector<16x256xbf16>, vector<256x128xbf16>, vector<16x128xf32> -> vector<16x128xf32>
    %cst_7 = arith.constant 1.1920929E-7 : f32
    %13 = vector.broadcast %cst_7 : f32 to vector<16x128xf32>
    %14 = arith.addf %12, %13 : vector<16x128xf32>
    %15 = math.log %14 : vector<16x128xf32>
    %cst_8 = arith.constant 0.434294492 : f32
    %16 = vector.broadcast %cst_8 : f32 to vector<16x128xf32>
    %17 = arith.mulf %15, %16 : vector<16x128xf32>
    %cst_9 = arith.constant 2.000000e+01 : f32
    %18 = vector.broadcast %cst_9 : f32 to vector<16x128xf32>
    %19 = arith.mulf %18, %17 : vector<16x128xf32>
    %cst_10 = arith.constant 0.99999988 : f32
    %20 = vector.broadcast %cst_10 : f32 to vector<16x128xf32>
    %21 = arith.mulf %19, %20 : vector<16x128xf32>
    %c0_11 = arith.constant 0 : index
    %c0_12 = arith.constant 0 : index
    %22 = vector.load %arg4[%c0_11, %c0_12] : memref<16x128xf32, #tpu.memory_space<vmem>>, vector<16x128xf32>
    tpu.vector_store %arg4[%c0_11, %c0_12], %21 {strides = array<i32>} : memref<16x128xf32, #tpu.memory_space<vmem>>, vector<16x128xf32>,
    return
  }
  func.func @transform_0(%arg0: i32) -> (i32, i32) {
    %c0_i32 = arith.constant 0 : i32
    %c0_i32_0 = arith.constant 0 : i32
    return %arg0, %c0_i32 : i32, i32
  }
  func.func @transform_1(%arg0: i32) -> (i32, i32) {
    %c0_i32 = arith.constant 0 : i32
    %c0_i32_0 = arith.constant 0 : i32
    %c0_i32_1 = arith.constant 0 : i32
    return %c0_i32, %c0_i32_0 : i32, i32
  }
  func.func @transform_2(%arg0: i32) -> (i32, i32) {
    %c0_i32 = arith.constant 0 : i32
    %c0_i32_0 = arith.constant 0 : i32
    %c0_i32_1 = arith.constant 0 : i32
    return %c0_i32, %c0_i32_0 : i32, i32
  }
  func.func @transform_3(%arg0: i32) -> (i32, i32) {
    %c0_i32 = arith.constant 0 : i32
    %c0_i32_0 = arith.constant 0 : i32
    return %arg0, %c0_i32 : i32, i32
  }
}

</mosaic_0001>

<llo_original>
// kernel: tpu_custom_call.1
$region0: #{tpu_custom_call.1}
  #allocation0 [shape = 'u32[]', space=smem, size = 0x4, offset = 0x4, fixed_abs, tag = 'smem constant byte address 0x4 - core index']
  #allocation1 [shape = 'u32[72,128]{1,0:T(1,128)}', space=vmem, size = 0x9000, scoped, tag = 'internal scratch']
  %s0 = inlined_call_operand.hbm [shape: bf16[32,512], index: 0, kind: input, shape index: {}]
  %s1 = inlined_call_operand.hbm [shape: bf16[512,512], index: 1, kind: input, shape index: {}]
  %s2 = inlined_call_operand.hbm [shape: bf16[256,128], index: 2, kind: input, shape index: {}]
  %s3 = inlined_call_operand.hbm [shape: f32[32,128], index: 3, kind: output, shape index: {}]
  %s4 = sld [smem:[#allocation0]]
  $region57: #{tpu_custom_call.1} parent=0
    _
  %s6 = ssub.s32 1, %s4
  %s7 = scalar_select 0, %s6, %s4
  $region1: #{tpu_custom_call.1} parent=0
    #allocation2 [shape = 'u8[32768]{0}', space=vmem, size = 0x8000, scoped, tag = 'input window, operand 0']
    #allocation3 [shape = 's32[2]{0}', space=sflag, size = 0x8, scoped, tag = 'scoped memory for tpu_custom_call.1']
    #allocation4 [shape = 's32[2]{0}', space=sflag, size = 0x8, scoped, tag = 'scoped memory for tpu_custom_call.1']
    #allocation5 [shape = 'u8[524288]{0}', space=vmem, size = 0x80000, scoped, tag = 'input window, operand 1, single buffered']
    #allocation6 [shape = 's32[1]{0}', space=sflag, size = 0x4, scoped, tag = 'scoped memory for tpu_custom_call.1']
    #allocation7 [shape = 'u8[65536]{0}', space=vmem, size = 0x10000, scoped, tag = 'input window, operand 2, single buffered']
    #allocation8 [shape = 'u8[16384]{0}', space=vmem, size = 0x4000, scoped, tag = 'output window, operand 0']
    %8 = vsyncpa [#allocation3], 0
    %s9 = scalar_lea.sflag [#allocation3], 1
    %10 = vsyncpa %s9, 0
    %11 = vsyncpa [#allocation6], 0
    %12 = vsyncpa [#allocation4], 0
    %s13 = scalar_lea.sflag [#allocation4], 1
    %14 = vsyncpa %s13, 0
    loop: start=0, step=1, limit=4
    $region2: #{tpu_custom_call.1} parent=1 // loop_pre_header
      _
    $region3: #{tpu_custom_call.1} parent=1 // loop_header
      %s16 = sphi 0, %s20
      %p17 = scmp.ge.s32.totalorder %s16, 4
      %s26 = sphi 0, %s28
      %s29 = sphi 0, %s26
      %s30 = sphi 0, %s29
      %s46 = sphi 0, %s30
      %s50 = sphi 0, %s50
      %s52 = sphi 0, %s50
      %s53 = sphi 0, %s52
      %s67 = sphi 0, %s53
      %s71 = sphi 0, %s71
      %s73 = sphi 0, %s71
      %s74 = sphi 0, %s73
      %s88 = sphi 0, %s74
      %s94 = sphi 0, %s96
      %s97 = sphi 0, %s94
      %s98 = sphi 0, %s97
      %s114 = sphi 0, %s98
    $region4: #{tpu_custom_call.1} parent=1 // loop_header_branch
      %19 = sbr.rel (%p17) target = $region8
    $region5: #{tpu_custom_call.1} parent=1 // loop_body
      %s21 = ssub.s32 %s16, 1
      %s22 = ssub.s32 %s16, 2
      %s23 = sadd.s32 %s16, 1
      %s24 = ssub.s32 %s16, %s23
      %p25 = scmp.eq.s32.totalorder %s24, 0
      %s27 = sadd.s32 %s26, 1
      %s28 = scalar_select %p25, %s26, %s27
      %p31 = pneg %p25
      %p32 = scmp.eq.s32.totalorder %s16, 1
      %p33 = por %p31, %p32
      %p34 = scmp.ne.s32.totalorder %s26, %s29
      %p35 = scmp.eq.s32.totalorder %s16, 0
      %p36 = por %p34, %p35
      %p37 = scmp.ne.s32.totalorder %s26, %s29
      %p38 = scmp.eq.s32.totalorder %s21, 1
      %p39 = por %p37, %p38
      %p40 = scmp.ne.s32.totalorder %s29, %s30
      %p41 = scmp.eq.s32.totalorder %s21, 0
      %p42 = por %p40, %p41
      %p43 = scmp.ne.s32.totalorder %s29, %s30
      %p44 = scmp.eq.s32.totalorder %s22, 1
      %p45 = por %p43, %p44
      %p47 = scmp.ne.s32.totalorder %s30, %s46
      %p48 = scmp.eq.s32.totalorder %s22, 0
      %p49 = por %p47, %p48
      %s51 = sadd.s32 %s50, 1
      %p54 = scmp.eq.s32.totalorder %s16, 1
      %p55 = scmp.ne.s32.totalorder %s50, %s52
      %p56 = scmp.eq.s32.totalorder %s16, 0
      %p57 = por %p55, %p56
      %p58 = scmp.ne.s32.totalorder %s50, %s52
      %p59 = scmp.eq.s32.totalorder %s21, 1
      %p60 = por %p58, %p59
      %p61 = scmp.ne.s32.totalorder %s52, %s53
      %p62 = scmp.eq.s32.totalorder %s21, 0
      %p63 = por %p61, %p62
      %p64 = scmp.ne.s32.totalorder %s52, %s53
      %p65 = scmp.eq.s32.totalorder %s22, 1
      %p66 = por %p64, %p65
      %p68 = scmp.ne.s32.totalorder %s53, %s67
      %p69 = scmp.eq.s32.totalorder %s22, 0
      %p70 = por %p68, %p69
      %s72 = sadd.s32 %s71, 1
      %p75 = scmp.eq.s32.totalorder %s16, 1
      %p76 = scmp.ne.s32.totalorder %s71, %s73
      %p77 = scmp.eq.s32.totalorder %s16, 0
      %p78 = por %p76, %p77
      %p79 = scmp.ne.s32.totalorder %s71, %s73
      %p80 = scmp.eq.s32.totalorder %s21, 1
      %p81 = por %p79, %p80
      %p82 = scmp.ne.s32.totalorder %s73, %s74
      %p83 = scmp.eq.s32.totalorder %s21, 0
      %p84 = por %p82, %p83
      %p85 = scmp.ne.s32.totalorder %s73, %s74
      %p86 = scmp.eq.s32.totalorder %s22, 1
      %p87 = por %p85, %p86
      %p89 = scmp.ne.s32.totalorder %s74, %s88
      %p90 = scmp.eq.s32.totalorder %s22, 0
      %p91 = por %p89, %p90
      %s92 = ssub.s32 %s16, %s23
      %p93 = scmp.eq.s32.totalorder %s92, 0
      %s95 = sadd.s32 %s94, 1
      %s96 = scalar_select %p93, %s94, %s95
      %p99 = pneg %p93
      %p100 = scmp.eq.s32.totalorder %s16, 1
      %p101 = por %p99, %p100
      %p102 = scmp.ne.s32.totalorder %s94, %s97
      %p103 = scmp.eq.s32.totalorder %s16, 0
      %p104 = por %p102, %p103
      %p105 = scmp.ne.s32.totalorder %s94, %s97
      %p106 = scmp.eq.s32.totalorder %s21, 1
      %p107 = por %p105, %p106
      %p108 = scmp.ne.s32.totalorder %s97, %s98
      %p109 = scmp.eq.s32.totalorder %s21, 0
      %p110 = por %p108, %p109
      %p111 = scmp.ne.s32.totalorder %s97, %s98
      %p112 = scmp.eq.s32.totalorder %s22, 1
      %p113 = por %p111, %p112
      %p115 = scmp.ne.s32.totalorder %s98, %s114
      %p116 = scmp.eq.s32.totalorder %s22, 0
      %p117 = por %p115, %p116
      %p118 = scmp.le.s32.totalorder 1, %s16
      %p119 = scmp.lt.s32.totalorder %s16, 3
      %p120 = pnand %p118, %p119
      %p121 = pneg %p120
      // Predicated region
      $region9: #{tpu_custom_call.1} parent=5 // pred_check
        _
      $region10: #{tpu_custom_call.1} parent=5 // pred_check_branch
        %123 = sbr.rel (%p120) target = $region12
      $region11: #{tpu_custom_call.1} parent=5 // pred_region
        %s124 = ssub.s32 %s16, 1
        // Predicated region
        $region13: #{tpu_custom_call.1} parent=11 // pred_check
          %p125 = pneg %p63
        $region14: #{tpu_custom_call.1} parent=11 // pred_check_branch
          %127 = sbr.rel (%p125) target = $region16
        $region15: #{tpu_custom_call.1} parent=11 // pred_region
          %129 = vsyncadd [#allocation6], 0
          %s130 = sshll.u32 %s1, 4
          %s131 = int_to_ptr.hbm [resolvable:$true] %s130
          %s132 = sshll.u32 [#allocation5], 4
          %s133 = int_to_ptr.vmem [resolvable:$true] %s132
          %138 = dma.hbm_to_vmem [thread:$0]  %s131, 16384, %s133, [#allocation6], 256, 256, 16
        $region16: #{tpu_custom_call.1} parent=11 // pred_fallthru
          _
        // Predicated region
        $region17: #{tpu_custom_call.1} parent=11 // pred_check
          %p139 = pneg %p84
        $region18: #{tpu_custom_call.1} parent=11 // pred_check_branch
          %141 = sbr.rel (%p139) target = $region20
        $region19: #{tpu_custom_call.1} parent=11 // pred_region
          %143 = vsyncadd [#allocation6], 0
          %s144 = sshll.u32 %s2, 4
          %s145 = int_to_ptr.hbm [resolvable:$true] %s144
          %s146 = sshll.u32 [#allocation7], 4
          %s147 = int_to_ptr.vmem [resolvable:$true] %s146
          %152 = dma.hbm_to_vmem [thread:$0]  %s145, 2048, %s147, [#allocation6], 64, 64, 4
        $region20: #{tpu_custom_call.1} parent=11 // pred_fallthru
          _
      $region12: #{tpu_custom_call.1} parent=5 // pred_fallthru
        _
      %p153 = scmp.lt.s32.totalorder %s16, 2
      // Predicated region
      $region21: #{tpu_custom_call.1} parent=5 // pred_check
        %p154 = pneg %p153
      $region22: #{tpu_custom_call.1} parent=5 // pred_check_branch
        %156 = sbr.rel (%p154) target = $region24
      $region23: #{tpu_custom_call.1} parent=5 // pred_region
        // Predicated region
        $region25: #{tpu_custom_call.1} parent=23 // pred_check
          %p157 = pneg %p36
        $region26: #{tpu_custom_call.1} parent=23 // pred_check_branch
          %159 = sbr.rel (%p157) target = $region28
        $region27: #{tpu_custom_call.1} parent=23 // pred_region
          %s160 = sand.u32 %s26, 1
          %s161 = scalar_lea.sflag [#allocation3], %s160
          %s162 = sand.u32 %s26, 1
          %s163 = smul.addr %s162, 32
          %s164 = scalar_lea.vmem [#allocation2], %s163
          %s165 = smul.u32 2, %s16
          %167 = vsyncadd %s161, 0
          %s168 = smul.addr %s165, 4
          %s169 = smul.addr %s168, 4
          %s170 = scalar_lea.hbm %s0, %s169
          %s171 = sshll.u32 %s170, 4
          %s172 = int_to_ptr.hbm [resolvable:$true] %s171
          %s173 = sshll.u32 %s164, 4
          %s174 = int_to_ptr.vmem [resolvable:$true] %s173
          %179 = dma.hbm_to_vmem [thread:$0]  %s172, 512, %s174, %s161, 256, 256, 16
        $region28: #{tpu_custom_call.1} parent=23 // pred_fallthru
          _
      $region24: #{tpu_custom_call.1} parent=5 // pred_fallthru
        _
      %p180 = scmp.le.s32.totalorder 1, %s16
      %p181 = scmp.lt.s32.totalorder %s16, 3
      %p182 = pnand %p180, %p181
      %p183 = pneg %p182
      // Predicated region
      $region29: #{tpu_custom_call.1} parent=5 // pred_check
        _
      $region30: #{tpu_custom_call.1} parent=5 // pred_check_branch
        %185 = sbr.rel (%p182) target = $region32
      $region31: #{tpu_custom_call.1} parent=5 // pred_region
        %s186 = ssub.s32 %s16, 1
        %s187 = sand.u32 %s29, 1
        %s188 = scalar_lea.sflag [#allocation3], %s187
        %s189 = sand.u32 %s29, 1
        %s190 = smul.addr %s189, 32
        %s191 = scalar_lea.vmem [#allocation2], %s190
        // Predicated region
        $region33: #{tpu_custom_call.1} parent=31 // pred_check
          %p192 = pneg %p42
        $region34: #{tpu_custom_call.1} parent=31 // pred_check_branch
          %194 = sbr.rel (%p192) target = $region36
        $region35: #{tpu_custom_call.1} parent=31 // pred_region
          %196 = dma.done %s188, 512
        $region36: #{tpu_custom_call.1} parent=31 // pred_fallthru
          _
        // Predicated region
        $region37: #{tpu_custom_call.1} parent=31 // pred_check
          %p197 = pneg %p63
        $region38: #{tpu_custom_call.1} parent=31 // pred_check_branch
          %199 = sbr.rel (%p197) target = $region40
        $region39: #{tpu_custom_call.1} parent=31 // pred_region
          %201 = dma.done [#allocation6], 16384
        $region40: #{tpu_custom_call.1} parent=31 // pred_fallthru
          _
        // Predicated region
        $region41: #{tpu_custom_call.1} parent=31 // pred_check
          %p202 = pneg %p84
        $region42: #{tpu_custom_call.1} parent=31 // pred_check_branch
          %204 = sbr.rel (%p202) target = $region44
        $region43: #{tpu_custom_call.1} parent=31 // pred_region
          %206 = dma.done [#allocation6], 2048
        $region44: #{tpu_custom_call.1} parent=31 // pred_fallthru
          _
        %s207 = sand.u32 %s29, 1
        %s208 = scalar_lea.sflag [#allocation3], %s207
        %s209 = sand.u32 %s29, 1
        %s210 = smul.addr %s209, 32
        %s211 = scalar_lea.vmem [#allocation2], %s210
        %p212 = pneg %p42
        %p213 = pneg %p39
        %p214 = pneg %p63
        %p215 = pneg %p60
        %p216 = pneg %p84
        %p217 = pneg %p81
        %p218 = pneg %p110
        %p219 = pneg %p107
        %s220 = sand.u32 %s97, 1
        %s221 = scalar_lea.sflag [#allocation4], %s220
        %s222 = sand.u32 %s97, 1
        %s223 = smul.addr %s222, 16
        %s224 = scalar_lea.vmem [#allocation8], %s223
        %s225 = smul.u32 2, %s21
        %s226 = smul.u32 2, %s21
        %v227 = vld [vmem:[%s191] sm:$0xff]
        %v228 = vld [vmem:[%s191 + $0x8] sm:$0xff]
        %v229 = vld [vmem:[%s191 + $0x10] sm:$0xff]
        %v230 = vld [vmem:[%s191 + $0x18] sm:$0xff]
        %v231 = vld [vmem:[#allocation5] sm:$0xff]
        %v232 = vld [vmem:[#allocation5 + $0x8] sm:$0xff]
        %v233 = vld [vmem:[#allocation5 + $0x10] sm:$0xff]
        %v234 = vld [vmem:[#allocation5 + $0x18] sm:$0xff]
        %v235 = vld [vmem:[#allocation5 + $0x20] sm:$0xff]
        %v236 = vld [vmem:[#allocation5 + $0x28] sm:$0xff]
        %v237 = vld [vmem:[#allocation5 + $0x30] sm:$0xff]
        %v238 = vld [vmem:[#allocation5 + $0x38] sm:$0xff]
        %v239 = vld [vmem:[#allocation5 + $0x40] sm:$0xff]
        %v240 = vld [vmem:[#allocation5 + $0x48] sm:$0xff]
        %v241 = vld [vmem:[#allocation5 + $0x50] sm:$0xff]
        %v242 = vld [vmem:[#allocation5 + $0x58] sm:$0xff]
        %v243 = vld [vmem:[#allocation5 + $0x60] sm:$0xff]
        %v244 = vld [vmem:[#allocation5 + $0x68] sm:$0xff]
        %v245 = vld [vmem:[#allocation5 + $0x70] sm:$0xff]
        %v246 = vld [vmem:[#allocation5 + $0x78] sm:$0xff]
        %v247 = vld [vmem:[#allocation5 + $0x80] sm:$0xff]
        %v248 = vld [vmem:[#allocation5 + $0x88] sm:$0xff]
        %v249 = vld [vmem:[#allocation5 + $0x90] sm:$0xff]
        %v250 = vld [vmem:[#allocation5 + $0x98] sm:$0xff]
        %v251 = vld [vmem:[#allocation5 + $0xa0] sm:$0xff]
        %v252 = vld [vmem:[#allocation5 + $0xa8] sm:$0xff]
        %v253 = vld [vmem:[#allocation5 + $0xb0] sm:$0xff]
        %v254 = vld [vmem:[#allocation5 + $0xb8] sm:$0xff]
        %v255 = vld [vmem:[#allocation5 + $0xc0] sm:$0xff]
        %v256 = vld [vmem:[#allocation5 + $0xc8] sm:$0xff]
        %v257 = vld [vmem:[#allocation5 + $0xd0] sm:$0xff]
        %v258 = vld [vmem:[#allocation5 + $0xd8] sm:$0xff]
        %v259 = vld [vmem:[#allocation5 + $0xe0] sm:$0xff]
        %v260 = vld [vmem:[#allocation5 + $0xe8] sm:$0xff]
        %v261 = vld [vmem:[#allocation5 + $0xf0] sm:$0xff]
        %v262 = vld [vmem:[#allocation5 + $0xf8] sm:$0xff]
        %v263 = vld [vmem:[#allocation5 + $0x100] sm:$0xff]
        %v264 = vld [vmem:[#allocation5 + $0x108] sm:$0xff]
        %v265 = vld [vmem:[#allocation5 + $0x110] sm:$0xff]
        %v266 = vld [vmem:[#allocation5 + $0x118] sm:$0xff]
        %v267 = vld [vmem:[#allocation5 + $0x120] sm:$0xff]
        %v268 = vld [vmem:[#allocation5 + $0x128] sm:$0xff]
        %v269 = vld [vmem:[#allocation5 + $0x130] sm:$0xff]
        %v270 = vld [vmem:[#allocation5 + $0x138] sm:$0xff]
        %v271 = vld [vmem:[#allocation5 + $0x140] sm:$0xff]
        %v272 = vld [vmem:[#allocation5 + $0x148] sm:$0xff]
        %v273 = vld [vmem:[#allocation5 + $0x150] sm:$0xff]
        %v274 = vld [vmem:[#allocation5 + $0x158] sm:$0xff]
        %v275 = vld [vmem:[#allocation5 + $0x160] sm:$0xff]
        %v276 = vld [vmem:[#allocation5 + $0x168] sm:$0xff]
        %v277 = vld [vmem:[#allocation5 + $0x170] sm:$0xff]
        %v278 = vld [vmem:[#allocation5 + $0x178] sm:$0xff]
        %v279 = vld [vmem:[#allocation5 + $0x180] sm:$0xff]
        %v280 = vld [vmem:[#allocation5 + $0x188] sm:$0xff]
        %v281 = vld [vmem:[#allocation5 + $0x190] sm:$0xff]
        %v282 = vld [vmem:[#allocation5 + $0x198] sm:$0xff]
        %v283 = vld [vmem:[#allocation5 + $0x1a0] sm:$0xff]
        %v284 = vld [vmem:[#allocation5 + $0x1a8] sm:$0xff]
        %v285 = vld [vmem:[#allocation5 + $0x1b0] sm:$0xff]
        %v286 = vld [vmem:[#allocation5 + $0x1b8] sm:$0xff]
        %v287 = vld [vmem:[#allocation5 + $0x1c0] sm:$0xff]
        %v288 = vld [vmem:[#allocation5 + $0x1c8] sm:$0xff]
        %v289 = vld [vmem:[#allocation5 + $0x1d0] sm:$0xff]
        %v290 = vld [vmem:[#allocation5 + $0x1d8] sm:$0xff]
        %v291 = vld [vmem:[#allocation5 + $0x1e0] sm:$0xff]
        %v292 = vld [vmem:[#allocation5 + $0x1e8] sm:$0xff]
        %v293 = vld [vmem:[#allocation5 + $0x1f0] sm:$0xff]
        %v294 = vld [vmem:[#allocation5 + $0x1f8] sm:$0xff]
        %v295 = vld [vmem:[#allocation5 + $0x200] sm:$0xff]
        %v296 = vld [vmem:[#allocation5 + $0x208] sm:$0xff]
        %v297 = vld [vmem:[#allocation5 + $0x210] sm:$0xff]
        %v298 = vld [vmem:[#allocation5 + $0x218] sm:$0xff]
        %v299 = vld [vmem:[#allocation5 + $0x220] sm:$0xff]
        %v300 = vld [vmem:[#allocation5 + $0x228] sm:$0xff]
        %v301 = vld [vmem:[#allocation5 + $0x230] sm:$0xff]
        %v302 = vld [vmem:[#allocation5 + $0x238] sm:$0xff]
        %v303 = vld [vmem:[#allocation5 + $0x240] sm:$0xff]
        %v304 = vld [vmem:[#allocation5 + $0x248] sm:$0xff]
        %v305 = vld [vmem:[#allocation5 + $0x250] sm:$0xff]
        %v306 = vld [vmem:[#allocation5 + $0x258] sm:$0xff]
        %v307 = vld [vmem:[#allocation5 + $0x260] sm:$0xff]
        %v308 = vld [vmem:[#allocation5 + $0x268] sm:$0xff]
        %v309 = vld [vmem:[#allocation5 + $0x270] sm:$0xff]
        %v310 = vld [vmem:[#allocation5 + $0x278] sm:$0xff]
        %v311 = vld [vmem:[#allocation5 + $0x280] sm:$0xff]
        %v312 = vld [vmem:[#allocation5 + $0x288] sm:$0xff]
        %v313 = vld [vmem:[#allocation5 + $0x290] sm:$0xff]
        %v314 = vld [vmem:[#allocation5 + $0x298] sm:$0xff]
        %v315 = vld [vmem:[#allocation5 + $0x2a0] sm:$0xff]
        %v316 = vld [vmem:[#allocation5 + $0x2a8] sm:$0xff]
        %v317 = vld [vmem:[#allocation5 + $0x2b0] sm:$0xff]
        %v318 = vld [vmem:[#allocation5 + $0x2b8] sm:$0xff]
        %v319 = vld [vmem:[#allocation5 + $0x2c0] sm:$0xff]
        %v320 = vld [vmem:[#allocation5 + $0x2c8] sm:$0xff]
        %v321 = vld [vmem:[#allocation5 + $0x2d0] sm:$0xff]
        %v322 = vld [vmem:[#allocation5 + $0x2d8] sm:$0xff]
        %v323 = vld [vmem:[#allocation5 + $0x2e0] sm:$0xff]
        %v324 = vld [vmem:[#allocation5 + $0x2e8] sm:$0xff]
        %v325 = vld [vmem:[#allocation5 + $0x2f0] sm:$0xff]
        %v326 = vld [vmem:[#allocation5 + $0x2f8] sm:$0xff]
        %v327 = vld [vmem:[#allocation5 + $0x300] sm:$0xff]
        %v328 = vld [vmem:[#allocation5 + $0x308] sm:$0xff]
        %v329 = vld [vmem:[#allocation5 + $0x310] sm:$0xff]
        %v330 = vld [vmem:[#allocation5 + $0x318] sm:$0xff]
        %v331 = vld [vmem:[#allocation5 + $0x320] sm:$0xff]
        %v332 = vld [vmem:[#allocation5 + $0x328] sm:$0xff]
        %v333 = vld [vmem:[#allocation5 + $0x330] sm:$0xff]
        %v334 = vld [vmem:[#allocation5 + $0x338] sm:$0xff]
        %v335 = vld [vmem:[#allocation5 + $0x340] sm:$0xff]
        %v336 = vld [vmem:[#allocation5 + $0x348] sm:$0xff]
        %v337 = vld [vmem:[#allocation5 + $0x350] sm:$0xff]
        %v338 = vld [vmem:[#allocation5 + $0x358] sm:$0xff]
        %v339 = vld [vmem:[#allocation5 + $0x360] sm:$0xff]
        %v340 = vld [vmem:[#allocation5 + $0x368] sm:$0xff]
        %v341 = vld [vmem:[#allocation5 + $0x370] sm:$0xff]
        %v342 = vld [vmem:[#allocation5 + $0x378] sm:$0xff]
        %v343 = vld [vmem:[#allocation5 + $0x380] sm:$0xff]
        %v344 = vld [vmem:[#allocation5 + $0x388] sm:$0xff]
        %v345 = vld [vmem:[#allocation5 + $0x390] sm:$0xff]
        %v346 = vld [vmem:[#allocation5 + $0x398] sm:$0xff]
        %v347 = vld [vmem:[#allocation5 + $0x3a0] sm:$0xff]
        %v348 = vld [vmem:[#allocation5 + $0x3a8] sm:$0xff]
        %v349 = vld [vmem:[#allocation5 + $0x3b0] sm:$0xff]
        %v350 = vld [vmem:[#allocation5 + $0x3b8] sm:$0xff]
        %v351 = vld [vmem:[#allocation5 + $0x3c0] sm:$0xff]
        %v352 = vld [vmem:[#allocation5 + $0x3c8] sm:$0xff]
        %v353 = vld [vmem:[#allocation5 + $0x3d0] sm:$0xff]
        %v354 = vld [vmem:[#allocation5 + $0x3d8] sm:$0xff]
        %v355 = vld [vmem:[#allocation5 + $0x3e0] sm:$0xff]
        %v356 = vld [vmem:[#allocation5 + $0x3e8] sm:$0xff]
        %v357 = vld [vmem:[#allocation5 + $0x3f0] sm:$0xff]
        %v358 = vld [vmem:[#allocation5 + $0x3f8] sm:$0xff]
        %v363 = vunpack.c.l.b16 %v227
        %v364 = vunpack.c.h.b16 %v227
        %v365 = vunpack.c.l.b16 %v228
        %v366 = vunpack.c.h.b16 %v228
        %v367 = vunpack.c.l.b16 %v229
        %v368 = vunpack.c.h.b16 %v229
        %v369 = vunpack.c.l.b16 %v230
        %v370 = vunpack.c.h.b16 %v230
        %v371 = vpack.c.b16 %v367, %v363
        %v372 = vpack.c.b16 %v368, %v364
        %v373 = vpack.c.b16 %v369, %v365
        %v374 = vpack.c.b16 %v370, %v366
        %v507 = vunpack.c.l.b16 %v231
        %v508 = vunpack.c.h.b16 %v231
        %v509 = vunpack.c.l.b16 %v232
        %v510 = vunpack.c.h.b16 %v232
        %v511 = vunpack.c.l.b16 %v233
        %v512 = vunpack.c.h.b16 %v233
        %v513 = vunpack.c.l.b16 %v234
        %v514 = vunpack.c.h.b16 %v234
        %v515 = vunpack.c.l.b16 %v235
        %v516 = vunpack.c.h.b16 %v235
        %v517 = vunpack.c.l.b16 %v236
        %v518 = vunpack.c.h.b16 %v236
        %v519 = vunpack.c.l.b16 %v237
        %v520 = vunpack.c.h.b16 %v237
        %v521 = vunpack.c.l.b16 %v238
        %v522 = vunpack.c.h.b16 %v238
        %v523 = vunpack.c.l.b16 %v239
        %v524 = vunpack.c.h.b16 %v239
        %v525 = vunpack.c.l.b16 %v240
        %v526 = vunpack.c.h.b16 %v240
        %v527 = vunpack.c.l.b16 %v241
        %v528 = vunpack.c.h.b16 %v241
        %v529 = vunpack.c.l.b16 %v242
        %v530 = vunpack.c.h.b16 %v242
        %v531 = vunpack.c.l.b16 %v243
        %v532 = vunpack.c.h.b16 %v243
        %v533 = vunpack.c.l.b16 %v244
        %v534 = vunpack.c.h.b16 %v244
        %v535 = vunpack.c.l.b16 %v245
        %v536 = vunpack.c.h.b16 %v245
        %v537 = vunpack.c.l.b16 %v246
        %v538 = vunpack.c.h.b16 %v246
        %v539 = vunpack.c.l.b16 %v247
        %v540 = vunpack.c.h.b16 %v247
        %v541 = vunpack.c.l.b16 %v248
        %v542 = vunpack.c.h.b16 %v248
        %v543 = vunpack.c.l.b16 %v249
        %v544 = vunpack.c.h.b16 %v249
        %v545 = vunpack.c.l.b16 %v250
        %v546 = vunpack.c.h.b16 %v250
        %v547 = vunpack.c.l.b16 %v251
        %v548 = vunpack.c.h.b16 %v251
        %v549 = vunpack.c.l.b16 %v252
        %v550 = vunpack.c.h.b16 %v252
        %v551 = vunpack.c.l.b16 %v253
        %v552 = vunpack.c.h.b16 %v253
        %v553 = vunpack.c.l.b16 %v254
        %v554 = vunpack.c.h.b16 %v254
        %v555 = vunpack.c.l.b16 %v255
        %v556 = vunpack.c.h.b16 %v255
        %v557 = vunpack.c.l.b16 %v256
        %v558 = vunpack.c.h.b16 %v256
        %v559 = vunpack.c.l.b16 %v257
        %v560 = vunpack.c.h.b16 %v257
        %v561 = vunpack.c.l.b16 %v258
        %v562 = vunpack.c.h.b16 %v258
        %v563 = vunpack.c.l.b16 %v259
        %v564 = vunpack.c.h.b16 %v259
        %v565 = vunpack.c.l.b16 %v260
        %v566 = vunpack.c.h.b16 %v260
        %v567 = vunpack.c.l.b16 %v261
        %v568 = vunpack.c.h.b16 %v261
        %v569 = vunpack.c.l.b16 %v262
        %v570 = vunpack.c.h.b16 %v262
        %v571 = vunpack.c.l.b16 %v263
        %v572 = vunpack.c.h.b16 %v263
        %v573 = vunpack.c.l.b16 %v264
        %v574 = vunpack.c.h.b16 %v264
        %v575 = vunpack.c.l.b16 %v265
        %v576 = vunpack.c.h.b16 %v265
        %v577 = vunpack.c.l.b16 %v266
        %v578 = vunpack.c.h.b16 %v266
        %v579 = vunpack.c.l.b16 %v267
        %v580 = vunpack.c.h.b16 %v267
        %v581 = vunpack.c.l.b16 %v268
        %v582 = vunpack.c.h.b16 %v268
        %v583 = vunpack.c.l.b16 %v269
        %v584 = vunpack.c.h.b16 %v269
        %v585 = vunpack.c.l.b16 %v270
        %v586 = vunpack.c.h.b16 %v270
        %v587 = vunpack.c.l.b16 %v271
        %v588 = vunpack.c.h.b16 %v271
        %v589 = vunpack.c.l.b16 %v272
        %v590 = vunpack.c.h.b16 %v272
        %v591 = vunpack.c.l.b16 %v273
        %v592 = vunpack.c.h.b16 %v273
        %v593 = vunpack.c.l.b16 %v274
        %v594 = vunpack.c.h.b16 %v274
        %v595 = vunpack.c.l.b16 %v275
        %v596 = vunpack.c.h.b16 %v275
        %v597 = vunpack.c.l.b16 %v276
        %v598 = vunpack.c.h.b16 %v276
        %v599 = vunpack.c.l.b16 %v277
        %v600 = vunpack.c.h.b16 %v277
        %v601 = vunpack.c.l.b16 %v278
        %v602 = vunpack.c.h.b16 %v278
        %v603 = vunpack.c.l.b16 %v279
        %v604 = vunpack.c.h.b16 %v279
        %v605 = vunpack.c.l.b16 %v280
        %v606 = vunpack.c.h.b16 %v280
        %v607 = vunpack.c.l.b16 %v281
        %v608 = vunpack.c.h.b16 %v281
        %v609 = vunpack.c.l.b16 %v282
        %v610 = vunpack.c.h.b16 %v282
        %v611 = vunpack.c.l.b16 %v283
        %v612 = vunpack.c.h.b16 %v283
        %v613 = vunpack.c.l.b16 %v284
        %v614 = vunpack.c.h.b16 %v284
        %v615 = vunpack.c.l.b16 %v285
        %v616 = vunpack.c.h.b16 %v285
        %v617 = vunpack.c.l.b16 %v286
        %v618 = vunpack.c.h.b16 %v286
        %v619 = vunpack.c.l.b16 %v287
        %v620 = vunpack.c.h.b16 %v287
        %v621 = vunpack.c.l.b16 %v288
        %v622 = vunpack.c.h.b16 %v288
        %v623 = vunpack.c.l.b16 %v289
        %v624 = vunpack.c.h.b16 %v289
        %v625 = vunpack.c.l.b16 %v290
        %v626 = vunpack.c.h.b16 %v290
        %v627 = vunpack.c.l.b16 %v291
        %v628 = vunpack.c.h.b16 %v291
        %v629 = vunpack.c.l.b16 %v292
        %v630 = vunpack.c.h.b16 %v292
        %v631 = vunpack.c.l.b16 %v293
        %v632 = vunpack.c.h.b16 %v293
        %v633 = vunpack.c.l.b16 %v294
        %v634 = vunpack.c.h.b16 %v294
        %v635 = vunpack.c.l.b16 %v295
        %v636 = vunpack.c.h.b16 %v295
        %v637 = vunpack.c.l.b16 %v296
        %v638 = vunpack.c.h.b16 %v296
        %v639 = vunpack.c.l.b16 %v297
        %v640 = vunpack.c.h.b16 %v297
        %v641 = vunpack.c.l.b16 %v298
        %v642 = vunpack.c.h.b16 %v298
        %v643 = vunpack.c.l.b16 %v299
        %v644 = vunpack.c.h.b16 %v299
        %v645 = vunpack.c.l.b16 %v300
        %v646 = vunpack.c.h.b16 %v300
        %v647 = vunpack.c.l.b16 %v301
        %v648 = vunpack.c.h.b16 %v301
        %v649 = vunpack.c.l.b16 %v302
        %v650 = vunpack.c.h.b16 %v302
        %v651 = vunpack.c.l.b16 %v303
        %v652 = vunpack.c.h.b16 %v303
        %v653 = vunpack.c.l.b16 %v304
        %v654 = vunpack.c.h.b16 %v304
        %v655 = vunpack.c.l.b16 %v305
        %v656 = vunpack.c.h.b16 %v305
        %v657 = vunpack.c.l.b16 %v306
        %v658 = vunpack.c.h.b16 %v306
        %v659 = vunpack.c.l.b16 %v307
        %v660 = vunpack.c.h.b16 %v307
        %v661 = vunpack.c.l.b16 %v308
        %v662 = vunpack.c.h.b16 %v308
        %v663 = vunpack.c.l.b16 %v309
        %v664 = vunpack.c.h.b16 %v309
        %v665 = vunpack.c.l.b16 %v310
        %v666 = vunpack.c.h.b16 %v310
        %v667 = vunpack.c.l.b16 %v311
        %v668 = vunpack.c.h.b16 %v311
        %v669 = vunpack.c.l.b16 %v312
        %v670 = vunpack.c.h.b16 %v312
        %v671 = vunpack.c.l.b16 %v313
        %v672 = vunpack.c.h.b16 %v313
        %v673 = vunpack.c.l.b16 %v314
        %v674 = vunpack.c.h.b16 %v314
        %v675 = vunpack.c.l.b16 %v315
        %v676 = vunpack.c.h.b16 %v315
        %v677 = vunpack.c.l.b16 %v316
        %v678 = vunpack.c.h.b16 %v316
        %v679 = vunpack.c.l.b16 %v317
        %v680 = vunpack.c.h.b16 %v317
        %v681 = vunpack.c.l.b16 %v318
        %v682 = vunpack.c.h.b16 %v318
        %v683 = vunpack.c.l.b16 %v319
        %v684 = vunpack.c.h.b16 %v319
        %v685 = vunpack.c.l.b16 %v320
        %v686 = vunpack.c.h.b16 %v320
        %v687 = vunpack.c.l.b16 %v321
        %v688 = vunpack.c.h.b16 %v321
        %v689 = vunpack.c.l.b16 %v322
        %v690 = vunpack.c.h.b16 %v322
        %v691 = vunpack.c.l.b16 %v323
        %v692 = vunpack.c.h.b16 %v323
        %v693 = vunpack.c.l.b16 %v324
        %v694 = vunpack.c.h.b16 %v324
        %v695 = vunpack.c.l.b16 %v325
        %v696 = vunpack.c.h.b16 %v325
        %v697 = vunpack.c.l.b16 %v326
        %v698 = vunpack.c.h.b16 %v326
        %v699 = vunpack.c.l.b16 %v327
        %v700 = vunpack.c.h.b16 %v327
        %v701 = vunpack.c.l.b16 %v328
        %v702 = vunpack.c.h.b16 %v328
        %v703 = vunpack.c.l.b16 %v329
        %v704 = vunpack.c.h.b16 %v329
        %v705 = vunpack.c.l.b16 %v330
        %v706 = vunpack.c.h.b16 %v330
        %v707 = vunpack.c.l.b16 %v331
        %v708 = vunpack.c.h.b16 %v331
        %v709 = vunpack.c.l.b16 %v332
        %v710 = vunpack.c.h.b16 %v332
        %v711 = vunpack.c.l.b16 %v333
        %v712 = vunpack.c.h.b16 %v333
        %v713 = vunpack.c.l.b16 %v334
        %v714 = vunpack.c.h.b16 %v334
        %v715 = vunpack.c.l.b16 %v335
        %v716 = vunpack.c.h.b16 %v335
        %v717 = vunpack.c.l.b16 %v336
        %v718 = vunpack.c.h.b16 %v336
        %v719 = vunpack.c.l.b16 %v337
        %v720 = vunpack.c.h.b16 %v337
        %v721 = vunpack.c.l.b16 %v338
        %v722 = vunpack.c.h.b16 %v338
        %v723 = vunpack.c.l.b16 %v339
        %v724 = vunpack.c.h.b16 %v339
        %v725 = vunpack.c.l.b16 %v340
        %v726 = vunpack.c.h.b16 %v340
        %v727 = vunpack.c.l.b16 %v341
        %v728 = vunpack.c.h.b16 %v341
        %v729 = vunpack.c.l.b16 %v342
        %v730 = vunpack.c.h.b16 %v342
        %v731 = vunpack.c.l.b16 %v343
        %v732 = vunpack.c.h.b16 %v343
        %v733 = vunpack.c.l.b16 %v344
        %v734 = vunpack.c.h.b16 %v344
        %v735 = vunpack.c.l.b16 %v345
        %v736 = vunpack.c.h.b16 %v345
        %v737 = vunpack.c.l.b16 %v346
        %v738 = vunpack.c.h.b16 %v346
        %v739 = vunpack.c.l.b16 %v347
        %v740 = vunpack.c.h.b16 %v347
        %v741 = vunpack.c.l.b16 %v348
        %v742 = vunpack.c.h.b16 %v348
        %v743 = vunpack.c.l.b16 %v349
        %v744 = vunpack.c.h.b16 %v349
        %v745 = vunpack.c.l.b16 %v350
        %v746 = vunpack.c.h.b16 %v350
        %v747 = vunpack.c.l.b16 %v351
        %v748 = vunpack.c.h.b16 %v351
        %v749 = vunpack.c.l.b16 %v352
        %v750 = vunpack.c.h.b16 %v352
        %v751 = vunpack.c.l.b16 %v353
        %v752 = vunpack.c.h.b16 %v353
        %v753 = vunpack.c.l.b16 %v354
        %v754 = vunpack.c.h.b16 %v354
        %v755 = vunpack.c.l.b16 %v355
        %v756 = vunpack.c.h.b16 %v355
        %v757 = vunpack.c.l.b16 %v356
        %v758 = vunpack.c.h.b16 %v356
        %v759 = vunpack.c.l.b16 %v357
        %v760 = vunpack.c.h.b16 %v357
        %v761 = vunpack.c.l.b16 %v358
        %v762 = vunpack.c.h.b16 %v358
        %v763 = vpack.c.b16 %v511, %v507
        %v764 = vpack.c.b16 %v512, %v508
        %v765 = vpack.c.b16 %v513, %v509
        %v766 = vpack.c.b16 %v514, %v510
        %v767 = vpack.c.b16 %v519, %v515
        %v768 = vpack.c.b16 %v520, %v516
        %v769 = vpack.c.b16 %v521, %v517
        %v770 = vpack.c.b16 %v522, %v518
        %v771 = vpack.c.b16 %v527, %v523
        %v772 = vpack.c.b16 %v528, %v524
        %v773 = vpack.c.b16 %v529, %v525
        %v774 = vpack.c.b16 %v530, %v526
        %v775 = vpack.c.b16 %v535, %v531
        %v776 = vpack.c.b16 %v536, %v532
        %v777 = vpack.c.b16 %v537, %v533
        %v778 = vpack.c.b16 %v538, %v534
        %v779 = vpack.c.b16 %v543, %v539
        %v780 = vpack.c.b16 %v544, %v540
        %v781 = vpack.c.b16 %v545, %v541
        %v782 = vpack.c.b16 %v546, %v542
        %v783 = vpack.c.b16 %v551, %v547
        %v784 = vpack.c.b16 %v552, %v548
        %v785 = vpack.c.b16 %v553, %v549
        %v786 = vpack.c.b16 %v554, %v550
        %v787 = vpack.c.b16 %v559, %v555
        %v788 = vpack.c.b16 %v560, %v556
        %v789 = vpack.c.b16 %v561, %v557
        %v790 = vpack.c.b16 %v562, %v558
        %v791 = vpack.c.b16 %v567, %v563
        %v792 = vpack.c.b16 %v568, %v564
        %v793 = vpack.c.b16 %v569, %v565
        %v794 = vpack.c.b16 %v570, %v566
        %v795 = vpack.c.b16 %v575, %v571
        %v796 = vpack.c.b16 %v576, %v572
        %v797 = vpack.c.b16 %v577, %v573
        %v798 = vpack.c.b16 %v578, %v574
        %v799 = vpack.c.b16 %v583, %v579
        %v800 = vpack.c.b16 %v584, %v580
        %v801 = vpack.c.b16 %v585, %v581
        %v802 = vpack.c.b16 %v586, %v582
        %v803 = vpack.c.b16 %v591, %v587
        %v804 = vpack.c.b16 %v592, %v588
        %v805 = vpack.c.b16 %v593, %v589
        %v806 = vpack.c.b16 %v594, %v590
        %v807 = vpack.c.b16 %v599, %v595
        %v808 = vpack.c.b16 %v600, %v596
        %v809 = vpack.c.b16 %v601, %v597
        %v810 = vpack.c.b16 %v602, %v598
        %v811 = vpack.c.b16 %v607, %v603
        %v812 = vpack.c.b16 %v608, %v604
        %v813 = vpack.c.b16 %v609, %v605
        %v814 = vpack.c.b16 %v610, %v606
        %v815 = vpack.c.b16 %v615, %v611
        %v816 = vpack.c.b16 %v616, %v612
        %v817 = vpack.c.b16 %v617, %v613
        %v818 = vpack.c.b16 %v618, %v614
        %v819 = vpack.c.b16 %v623, %v619
        %v820 = vpack.c.b16 %v624, %v620
        %v821 = vpack.c.b16 %v625, %v621
        %v822 = vpack.c.b16 %v626, %v622
        %v823 = vpack.c.b16 %v631, %v627
        %v824 = vpack.c.b16 %v632, %v628
        %v825 = vpack.c.b16 %v633, %v629
        %v826 = vpack.c.b16 %v634, %v630
        %v827 = vpack.c.b16 %v639, %v635
        %v828 = vpack.c.b16 %v640, %v636
        %v829 = vpack.c.b16 %v641, %v637
        %v830 = vpack.c.b16 %v642, %v638
        %v831 = vpack.c.b16 %v647, %v643
        %v832 = vpack.c.b16 %v648, %v644
        %v833 = vpack.c.b16 %v649, %v645
        %v834 = vpack.c.b16 %v650, %v646
        %v835 = vpack.c.b16 %v655, %v651
        %v836 = vpack.c.b16 %v656, %v652
        %v837 = vpack.c.b16 %v657, %v653
        %v838 = vpack.c.b16 %v658, %v654
        %v839 = vpack.c.b16 %v663, %v659
        %v840 = vpack.c.b16 %v664, %v660
        %v841 = vpack.c.b16 %v665, %v661
        %v842 = vpack.c.b16 %v666, %v662
        %v843 = vpack.c.b16 %v671, %v667
        %v844 = vpack.c.b16 %v672, %v668
        %v845 = vpack.c.b16 %v673, %v669
        %v846 = vpack.c.b16 %v674, %v670
        %v847 = vpack.c.b16 %v679, %v675
        %v848 = vpack.c.b16 %v680, %v676
        %v849 = vpack.c.b16 %v681, %v677
        %v850 = vpack.c.b16 %v682, %v678
        %v851 = vpack.c.b16 %v687, %v683
        %v852 = vpack.c.b16 %v688, %v684
        %v853 = vpack.c.b16 %v689, %v685
        %v854 = vpack.c.b16 %v690, %v686
        %v855 = vpack.c.b16 %v695, %v691
        %v856 = vpack.c.b16 %v696, %v692
        %v857 = vpack.c.b16 %v697, %v693
        %v858 = vpack.c.b16 %v698, %v694
        %v859 = vpack.c.b16 %v703, %v699
        %v860 = vpack.c.b16 %v704, %v700
        %v861 = vpack.c.b16 %v705, %v701
        %v862 = vpack.c.b16 %v706, %v702
        %v863 = vpack.c.b16 %v711, %v707
        %v864 = vpack.c.b16 %v712, %v708
        %v865 = vpack.c.b16 %v713, %v709
        %v866 = vpack.c.b16 %v714, %v710
        %v867 = vpack.c.b16 %v719, %v715
        %v868 = vpack.c.b16 %v720, %v716
        %v869 = vpack.c.b16 %v721, %v717
        %v870 = vpack.c.b16 %v722, %v718
        %v871 = vpack.c.b16 %v727, %v723
        %v872 = vpack.c.b16 %v728, %v724
        %v873 = vpack.c.b16 %v729, %v725
        %v874 = vpack.c.b16 %v730, %v726
        %v875 = vpack.c.b16 %v735, %v731
        %v876 = vpack.c.b16 %v736, %v732
        %v877 = vpack.c.b16 %v737, %v733
        %v878 = vpack.c.b16 %v738, %v734
        %v879 = vpack.c.b16 %v743, %v739
        %v880 = vpack.c.b16 %v744, %v740
        %v881 = vpack.c.b16 %v745, %v741
        %v882 = vpack.c.b16 %v746, %v742
        %v883 = vpack.c.b16 %v751, %v747
        %v884 = vpack.c.b16 %v752, %v748
        %v885 = vpack.c.b16 %v753, %v749
        %v886 = vpack.c.b16 %v754, %v750
        %v887 = vpack.c.b16 %v759, %v755
        %v888 = vpack.c.b16 %v760, %v756
        %v889 = vpack.c.b16 %v761, %v757
        %v890 = vpack.c.b16 %v762, %v758
        %1019 = vmatpush.bf16.msra.mxu0 %v791
        %1020 = vmatpush.bf16.msra.mxu0 %v787
        %1021 = vmatpush.bf16.msra.mxu0 %v783
        %1022 = vmatpush.bf16.msra.mxu0 %v779
        %1023 = vmatpush.bf16.msra.mxu0 %v775
        %1024 = vmatpush.bf16.msra.mxu0 %v771
        %1025 = vmatpush.bf16.msra.mxu0 %v767
        %1026 = vmatpush.bf16.msra.mxu0 %v763
        %1027 = vmatmul.bf16.gmra.mxu0 %v371
        %v1028 = vpop.f32.mrf.mxu0
        %v1029 = vadd.f32 0.0, %v1028
        %v1030 = vpop.f32.mrf.mxu0
        %v1031 = vadd.f32 0.0, %v1030
        %1032 = vdwg.mxu0
        %1033 = vmatpush.bf16.msra.mxu0 %v823
        %1034 = vmatpush.bf16.msra.mxu0 %v819
        %1035 = vmatpush.bf16.msra.mxu0 %v815
        %1036 = vmatpush.bf16.msra.mxu0 %v811
        %1037 = vmatpush.bf16.msra.mxu0 %v807
        %1038 = vmatpush.bf16.msra.mxu0 %v803
        %1039 = vmatpush.bf16.msra.mxu0 %v799
        %1040 = vmatpush.bf16.msra.mxu0 %v795
        %1041 = vmatmul.bf16.gmra.mxu0 %v372
        %v1042 = vpop.f32.mrf.mxu0
        %v1043 = vadd.f32 %v1029, %v1042
        %v1044 = vpop.f32.mrf.mxu0
        %v1045 = vadd.f32 %v1031, %v1044
        %1046 = vdwg.mxu0
        %1047 = vmatpush.bf16.msra.mxu0 %v855
        %1048 = vmatpush.bf16.msra.mxu0 %v851
        %1049 = vmatpush.bf16.msra.mxu0 %v847
        %1050 = vmatpush.bf16.msra.mxu0 %v843
        %1051 = vmatpush.bf16.msra.mxu0 %v839
        %1052 = vmatpush.bf16.msra.mxu0 %v835
        %1053 = vmatpush.bf16.msra.mxu0 %v831
        %1054 = vmatpush.bf16.msra.mxu0 %v827
        %1055 = vmatmul.bf16.gmra.mxu0 %v373
        %v1056 = vpop.f32.mrf.mxu0
        %v1057 = vadd.f32 %v1043, %v1056
        %v1058 = vpop.f32.mrf.mxu0
        %v1059 = vadd.f32 %v1045, %v1058
        %1060 = vdwg.mxu0
        %1061 = vmatpush.bf16.msra.mxu0 %v887
        %1062 = vmatpush.bf16.msra.mxu0 %v883
        %1063 = vmatpush.bf16.msra.mxu0 %v879
        %1064 = vmatpush.bf16.msra.mxu0 %v875
        %1065 = vmatpush.bf16.msra.mxu0 %v871
        %1066 = vmatpush.bf16.msra.mxu0 %v867
        %1067 = vmatpush.bf16.msra.mxu0 %v863
        %1068 = vmatpush.bf16.msra.mxu0 %v859
        %1069 = vmatmul.bf16.gmra.mxu0 %v374
        %v1070 = vpop.f32.mrf.mxu0
        %v1071 = vadd.f32 %v1057, %v1070
        %v1072 = vpop.f32.mrf.mxu0
        %v1073 = vadd.f32 %v1059, %v1072
        %1074 = vdwg.mxu0
        %1075 = vmatpush.bf16.msra.mxu0 %v792
        %1076 = vmatpush.bf16.msra.mxu0 %v788
        %1077 = vmatpush.bf16.msra.mxu0 %v784
        %1078 = vmatpush.bf16.msra.mxu0 %v780
        %1079 = vmatpush.bf16.msra.mxu0 %v776
        %1080 = vmatpush.bf16.msra.mxu0 %v772
        %1081 = vmatpush.bf16.msra.mxu0 %v768
        %1082 = vmatpush.bf16.msra.mxu0 %v764
        %1083 = vmatmul.bf16.gmra.mxu0 %v371
        %v1084 = vpop.f32.mrf.mxu0
        %v1085 = vadd.f32 0.0, %v1084
        %v1086 = vpop.f32.mrf.mxu0
        %v1087 = vadd.f32 0.0, %v1086
        %1088 = vdwg.mxu0
        %1089 = vmatpush.bf16.msra.mxu0 %v824
        %1090 = vmatpush.bf16.msra.mxu0 %v820
        %1091 = vmatpush.bf16.msra.mxu0 %v816
        %1092 = vmatpush.bf16.msra.mxu0 %v812
        %1093 = vmatpush.bf16.msra.mxu0 %v808
        %1094 = vmatpush.bf16.msra.mxu0 %v804
        %1095 = vmatpush.bf16.msra.mxu0 %v800
        %1096 = vmatpush.bf16.msra.mxu0 %v796
        %1097 = vmatmul.bf16.gmra.mxu0 %v372
        %v1098 = vpop.f32.mrf.mxu0
        %v1099 = vadd.f32 %v1085, %v1098
        %v1100 = vpop.f32.mrf.mxu0
        %v1101 = vadd.f32 %v1087, %v1100
        %1102 = vdwg.mxu0
        %1103 = vmatpush.bf16.msra.mxu0 %v856
        %1104 = vmatpush.bf16.msra.mxu0 %v852
        %1105 = vmatpush.bf16.msra.mxu0 %v848
        %1106 = vmatpush.bf16.msra.mxu0 %v844
        %1107 = vmatpush.bf16.msra.mxu0 %v840
        %1108 = vmatpush.bf16.msra.mxu0 %v836
        %1109 = vmatpush.bf16.msra.mxu0 %v832
        %1110 = vmatpush.bf16.msra.mxu0 %v828
        %1111 = vmatmul.bf16.gmra.mxu0 %v373
        %v1112 = vpop.f32.mrf.mxu0
        %v1113 = vadd.f32 %v1099, %v1112
        %v1114 = vpop.f32.mrf.mxu0
        %v1115 = vadd.f32 %v1101, %v1114
        %1116 = vdwg.mxu0
        %1117 = vmatpush.bf16.msra.mxu0 %v888
        %1118 = vmatpush.bf16.msra.mxu0 %v884
        %1119 = vmatpush.bf16.msra.mxu0 %v880
        %1120 = vmatpush.bf16.msra.mxu0 %v876
        %1121 = vmatpush.bf16.msra.mxu0 %v872
        %1122 = vmatpush.bf16.msra.mxu0 %v868
        %1123 = vmatpush.bf16.msra.mxu0 %v864
        %1124 = vmatpush.bf16.msra.mxu0 %v860
        %1125 = vmatmul.bf16.gmra.mxu0 %v374
        %v1126 = vpop.f32.mrf.mxu0
        %v1127 = vadd.f32 %v1113, %v1126
        %v1128 = vpop.f32.mrf.mxu0
        %v1129 = vadd.f32 %v1115, %v1128
        %1130 = vdwg.mxu0
        %1131 = vmatpush.bf16.msra.mxu0 %v793
        %1132 = vmatpush.bf16.msra.mxu0 %v789
        %1133 = vmatpush.bf16.msra.mxu0 %v785
        %1134 = vmatpush.bf16.msra.mxu0 %v781
        %1135 = vmatpush.bf16.msra.mxu0 %v777
        %1136 = vmatpush.bf16.msra.mxu0 %v773
        %1137 = vmatpush.bf16.msra.mxu0 %v769
        %1138 = vmatpush.bf16.msra.mxu0 %v765
        %1139 = vmatmul.bf16.gmra.mxu0 %v371
        %v1140 = vpop.f32.mrf.mxu0
        %v1141 = vadd.f32 0.0, %v1140
        %v1142 = vpop.f32.mrf.mxu0
        %v1143 = vadd.f32 0.0, %v1142
        %1144 = vdwg.mxu0
        %1145 = vmatpush.bf16.msra.mxu0 %v825
        %1146 = vmatpush.bf16.msra.mxu0 %v821
        %1147 = vmatpush.bf16.msra.mxu0 %v817
        %1148 = vmatpush.bf16.msra.mxu0 %v813
        %1149 = vmatpush.bf16.msra.mxu0 %v809
        %1150 = vmatpush.bf16.msra.mxu0 %v805
        %1151 = vmatpush.bf16.msra.mxu0 %v801
        %1152 = vmatpush.bf16.msra.mxu0 %v797
        %1153 = vmatmul.bf16.gmra.mxu0 %v372
        %v1154 = vpop.f32.mrf.mxu0
        %v1155 = vadd.f32 %v1141, %v1154
        %v1156 = vpop.f32.mrf.mxu0
        %v1157 = vadd.f32 %v1143, %v1156
        %1158 = vdwg.mxu0
        %1159 = vmatpush.bf16.msra.mxu0 %v857
        %1160 = vmatpush.bf16.msra.mxu0 %v853
        %1161 = vmatpush.bf16.msra.mxu0 %v849
        %1162 = vmatpush.bf16.msra.mxu0 %v845
        %1163 = vmatpush.bf16.msra.mxu0 %v841
        %1164 = vmatpush.bf16.msra.mxu0 %v837
        %1165 = vmatpush.bf16.msra.mxu0 %v833
        %1166 = vmatpush.bf16.msra.mxu0 %v829
        %1167 = vmatmul.bf16.gmra.mxu0 %v373
        %v1168 = vpop.f32.mrf.mxu0
        %v1169 = vadd.f32 %v1155, %v1168
        %v1170 = vpop.f32.mrf.mxu0
        %v1171 = vadd.f32 %v1157, %v1170
        %1172 = vdwg.mxu0
        %1173 = vmatpush.bf16.msra.mxu0 %v889
        %1174 = vmatpush.bf16.msra.mxu0 %v885
        %1175 = vmatpush.bf16.msra.mxu0 %v881
        %1176 = vmatpush.bf16.msra.mxu0 %v877
        %1177 = vmatpush.bf16.msra.mxu0 %v873
        %1178 = vmatpush.bf16.msra.mxu0 %v869
        %1179 = vmatpush.bf16.msra.mxu0 %v865
        %1180 = vmatpush.bf16.msra.mxu0 %v861
        %1181 = vmatmul.bf16.gmra.mxu0 %v374
        %v1182 = vpop.f32.mrf.mxu0
        %v1183 = vadd.f32 %v1169, %v1182
        %v1184 = vpop.f32.mrf.mxu0
        %v1185 = vadd.f32 %v1171, %v1184
        %1186 = vdwg.mxu0
        %1187 = vmatpush.bf16.msra.mxu0 %v794
        %1188 = vmatpush.bf16.msra.mxu0 %v790
        %1189 = vmatpush.bf16.msra.mxu0 %v786
        %1190 = vmatpush.bf16.msra.mxu0 %v782
        %1191 = vmatpush.bf16.msra.mxu0 %v778
        %1192 = vmatpush.bf16.msra.mxu0 %v774
        %1193 = vmatpush.bf16.msra.mxu0 %v770
        %1194 = vmatpush.bf16.msra.mxu0 %v766
        %1195 = vmatmul.bf16.gmra.mxu0 %v371
        %v1196 = vpop.f32.mrf.mxu0
        %v1197 = vadd.f32 0.0, %v1196
        %v1198 = vpop.f32.mrf.mxu0
        %v1199 = vadd.f32 0.0, %v1198
        %1200 = vdwg.mxu0
        %1201 = vmatpush.bf16.msra.mxu0 %v826
        %1202 = vmatpush.bf16.msra.mxu0 %v822
        %1203 = vmatpush.bf16.msra.mxu0 %v818
        %1204 = vmatpush.bf16.msra.mxu0 %v814
        %1205 = vmatpush.bf16.msra.mxu0 %v810
        %1206 = vmatpush.bf16.msra.mxu0 %v806
        %1207 = vmatpush.bf16.msra.mxu0 %v802
        %1208 = vmatpush.bf16.msra.mxu0 %v798
        %1209 = vmatmul.bf16.gmra.mxu0 %v372
        %v1210 = vpop.f32.mrf.mxu0
        %v1211 = vadd.f32 %v1197, %v1210
        %v1212 = vpop.f32.mrf.mxu0
        %v1213 = vadd.f32 %v1199, %v1212
        %1214 = vdwg.mxu0
        %1215 = vmatpush.bf16.msra.mxu0 %v858
        %1216 = vmatpush.bf16.msra.mxu0 %v854
        %1217 = vmatpush.bf16.msra.mxu0 %v850
        %1218 = vmatpush.bf16.msra.mxu0 %v846
        %1219 = vmatpush.bf16.msra.mxu0 %v842
        %1220 = vmatpush.bf16.msra.mxu0 %v838
        %1221 = vmatpush.bf16.msra.mxu0 %v834
        %1222 = vmatpush.bf16.msra.mxu0 %v830
        %1223 = vmatmul.bf16.gmra.mxu0 %v373
        %v1224 = vpop.f32.mrf.mxu0
        %v1225 = vadd.f32 %v1211, %v1224
        %v1226 = vpop.f32.mrf.mxu0
        %v1227 = vadd.f32 %v1213, %v1226
        %1228 = vdwg.mxu0
        %1229 = vmatpush.bf16.msra.mxu0 %v890
        %1230 = vmatpush.bf16.msra.mxu0 %v886
        %1231 = vmatpush.bf16.msra.mxu0 %v882
        %1232 = vmatpush.bf16.msra.mxu0 %v878
        %1233 = vmatpush.bf16.msra.mxu0 %v874
        %1234 = vmatpush.bf16.msra.mxu0 %v870
        %1235 = vmatpush.bf16.msra.mxu0 %v866
        %1236 = vmatpush.bf16.msra.mxu0 %v862
        %1237 = vmatmul.bf16.gmra.mxu0 %v374
        %v1238 = vpop.f32.mrf.mxu0
        %v1239 = vadd.f32 %v1225, %v1238
        %v1240 = vpop.f32.mrf.mxu0
        %v1241 = vadd.f32 %v1227, %v1240
        %1242 = vdwg.mxu0
        %v1243 = vmul.f32 %v1071, %v1071
        %v1244 = vmul.f32 %v1127, %v1127
        %v1245 = vmul.f32 %v1073, %v1073
        %v1246 = vmul.f32 %v1129, %v1129
        %v1247 = vmul.f32 %v1183, %v1183
        %v1248 = vmul.f32 %v1239, %v1239
        %v1249 = vmul.f32 %v1185, %v1185
        %v1250 = vmul.f32 %v1241, %v1241
        %v1251 = vadd.f32 %v1243, %v1247
        %v1252 = vadd.f32 %v1244, %v1248
        %v1253 = vadd.f32 %v1245, %v1249
        %v1254 = vadd.f32 %v1246, %v1250
        %v1255 = vmul.f32 %v1251, 0.001953125
        %v1256 = vmul.f32 %v1252, 0.001953125
        %v1257 = vmul.f32 %v1253, 0.001953125
        %v1258 = vmul.f32 %v1254, 0.001953125
        %v1259 = vpack.c.bf16 %v1257, %v1255
        %v1260 = vpack.c.bf16 %v1258, %v1256
        %v1261 = vld [vmem:[#allocation7] sm:$0xf]
        %v1262 = vld [vmem:[#allocation7 + $0x4] sm:$0xf]
        %v1263 = vld [vmem:[#allocation7 + $0x8] sm:$0xf]
        %v1264 = vld [vmem:[#allocation7 + $0xc] sm:$0xf]
        %v1265 = vld [vmem:[#allocation7 + $0x10] sm:$0xf]
        %v1266 = vld [vmem:[#allocation7 + $0x14] sm:$0xf]
        %v1267 = vld [vmem:[#allocation7 + $0x18] sm:$0xf]
        %v1268 = vld [vmem:[#allocation7 + $0x1c] sm:$0xf]
        %v1269 = vld [vmem:[#allocation7 + $0x20] sm:$0xf]
        %v1270 = vld [vmem:[#allocation7 + $0x24] sm:$0xf]
        %v1271 = vld [vmem:[#allocation7 + $0x28] sm:$0xf]
        %v1272 = vld [vmem:[#allocation7 + $0x2c] sm:$0xf]
        %v1273 = vld [vmem:[#allocation7 + $0x30] sm:$0xf]
        %v1274 = vld [vmem:[#allocation7 + $0x34] sm:$0xf]
        %v1275 = vld [vmem:[#allocation7 + $0x38] sm:$0xf]
        %v1276 = vld [vmem:[#allocation7 + $0x3c] sm:$0xf]
        %v1277 = vld [vmem:[#allocation7 + $0x40] sm:$0xf]
        %v1278 = vld [vmem:[#allocation7 + $0x44] sm:$0xf]
        %v1279 = vld [vmem:[#allocation7 + $0x48] sm:$0xf]
        %v1280 = vld [vmem:[#allocation7 + $0x4c] sm:$0xf]
        %v1281 = vld [vmem:[#allocation7 + $0x50] sm:$0xf]
        %v1282 = vld [vmem:[#allocation7 + $0x54] sm:$0xf]
        %v1283 = vld [vmem:[#allocation7 + $0x58] sm:$0xf]
        %v1284 = vld [vmem:[#allocation7 + $0x5c] sm:$0xf]
        %v1285 = vld [vmem:[#allocation7 + $0x60] sm:$0xf]
        %v1286 = vld [vmem:[#allocation7 + $0x64] sm:$0xf]
        %v1287 = vld [vmem:[#allocation7 + $0x68] sm:$0xf]
        %v1288 = vld [vmem:[#allocation7 + $0x6c] sm:$0xf]
        %v1289 = vld [vmem:[#allocation7 + $0x70] sm:$0xf]
        %v1290 = vld [vmem:[#allocation7 + $0x74] sm:$0xf]
        %v1291 = vld [vmem:[#allocation7 + $0x78] sm:$0xf]
        %v1292 = vld [vmem:[#allocation7 + $0x7c] sm:$0xf]
        %v1325 = vunpack.c.l.b16 %v1261
        %v1326 = vunpack.c.l.b16 %v1262
        %v1327 = vunpack.c.l.b16 %v1263
        %v1328 = vunpack.c.l.b16 %v1264
        %v1329 = vunpack.c.l.b16 %v1265
        %v1330 = vunpack.c.l.b16 %v1266
        %v1331 = vunpack.c.l.b16 %v1267
        %v1332 = vunpack.c.l.b16 %v1268
        %v1333 = vunpack.c.l.b16 %v1269
        %v1334 = vunpack.c.l.b16 %v1270
        %v1335 = vunpack.c.l.b16 %v1271
        %v1336 = vunpack.c.l.b16 %v1272
        %v1337 = vunpack.c.l.b16 %v1273
        %v1338 = vunpack.c.l.b16 %v1274
        %v1339 = vunpack.c.l.b16 %v1275
        %v1340 = vunpack.c.l.b16 %v1276
        %v1341 = vunpack.c.l.b16 %v1277
        %v1342 = vunpack.c.l.b16 %v1278
        %v1343 = vunpack.c.l.b16 %v1279
        %v1344 = vunpack.c.l.b16 %v1280
        %v1345 = vunpack.c.l.b16 %v1281
        %v1346 = vunpack.c.l.b16 %v1282
        %v1347 = vunpack.c.l.b16 %v1283
        %v1348 = vunpack.c.l.b16 %v1284
        %v1349 = vunpack.c.l.b16 %v1285
        %v1350 = vunpack.c.l.b16 %v1286
        %v1351 = vunpack.c.l.b16 %v1287
        %v1352 = vunpack.c.l.b16 %v1288
        %v1353 = vunpack.c.l.b16 %v1289
        %v1354 = vunpack.c.l.b16 %v1290
        %v1355 = vunpack.c.l.b16 %v1291
        %v1356 = vunpack.c.l.b16 %v1292
        %v1357 = vpack.c.b16 %v1326, %v1325
        %v1358 = vpack.c.b16 %v1328, %v1327
        %v1359 = vpack.c.b16 %v1330, %v1329
        %v1360 = vpack.c.b16 %v1332, %v1331
        %v1361 = vpack.c.b16 %v1334, %v1333
        %v1362 = vpack.c.b16 %v1336, %v1335
        %v1363 = vpack.c.b16 %v1338, %v1337
        %v1364 = vpack.c.b16 %v1340, %v1339
        %v1365 = vpack.c.b16 %v1342, %v1341
        %v1366 = vpack.c.b16 %v1344, %v1343
        %v1367 = vpack.c.b16 %v1346, %v1345
        %v1368 = vpack.c.b16 %v1348, %v1347
        %v1369 = vpack.c.b16 %v1350, %v1349
        %v1370 = vpack.c.b16 %v1352, %v1351
        %v1371 = vpack.c.b16 %v1354, %v1353
        %v1372 = vpack.c.b16 %v1356, %v1355
        %1389 = vmatpush.bf16.msra.mxu0 %v1364
        %1390 = vmatpush.bf16.msra.mxu0 %v1363
        %1391 = vmatpush.bf16.msra.mxu0 %v1362
        %1392 = vmatpush.bf16.msra.mxu0 %v1361
        %1393 = vmatpush.bf16.msra.mxu0 %v1360
        %1394 = vmatpush.bf16.msra.mxu0 %v1359
        %1395 = vmatpush.bf16.msra.mxu0 %v1358
        %1396 = vmatpush.bf16.msra.mxu0 %v1357
        %1397 = vmatmul.bf16.gmra.mxu0 %v1259
        %v1398 = vpop.f32.mrf.mxu0
        %v1399 = vadd.f32 1.1920929e-07, %v1398
        %v1400 = vpop.f32.mrf.mxu0
        %v1401 = vadd.f32 1.1920929e-07, %v1400
        %1402 = vdwg.mxu0
        %1403 = vmatpush.bf16.msra.mxu0 %v1372
        %1404 = vmatpush.bf16.msra.mxu0 %v1371
        %1405 = vmatpush.bf16.msra.mxu0 %v1370
        %1406 = vmatpush.bf16.msra.mxu0 %v1369
        %1407 = vmatpush.bf16.msra.mxu0 %v1368
        %1408 = vmatpush.bf16.msra.mxu0 %v1367
        %1409 = vmatpush.bf16.msra.mxu0 %v1366
        %1410 = vmatpush.bf16.msra.mxu0 %v1365
        %1411 = vmatmul.bf16.gmra.mxu0 %v1260
        %v1412 = vpop.f32.mrf.mxu0
        %v1413 = vadd.f32 %v1399, %v1412
        %v1414 = vpop.f32.mrf.mxu0
        %v1415 = vadd.f32 %v1401, %v1414
        %1416 = vdwg.mxu0
        %v1417 = vlog2.pop %v1413
        %v1418 = vmul.f32 %v1417, 0.6931472
        %v1419 = vlog2.pop %v1415
        %v1420 = vmul.f32 %v1419, 0.6931472
        %v1421 = vmul.f32 %v1418, 0.4342945
        %v1422 = vmul.f32 %v1420, 0.4342945
        %v1423 = vmul.f32 %v1421, 20.0
        %v1424 = vmul.f32 %v1422, 20.0
        %v1425 = vmul.f32 %v1423, 0.9999999
        %v1426 = vmul.f32 %v1424, 0.9999999
        %1427 = vst [vmem:[%s224] sm:$0xff] %v1425
        %1428 = vst [vmem:[%s224 + $0x8] sm:$0xff] %v1426
        %s1429 = sand.u32 %s97, 1
        %s1430 = scalar_lea.sflag [#allocation4], %s1429
        %s1431 = sand.u32 %s97, 1
        %s1432 = smul.addr %s1431, 16
        %s1433 = scalar_lea.vmem [#allocation8], %s1432
        // Predicated region
        $region45: #{tpu_custom_call.1} parent=31 // pred_check
          %p1434 = pneg %p107
        $region46: #{tpu_custom_call.1} parent=31 // pred_check_branch
          %1436 = sbr.rel (%p1434) target = $region48
        $region47: #{tpu_custom_call.1} parent=31 // pred_region
          %s1437 = smul.u32 2, %s21
          %1439 = vsyncadd %s1430, 0
          %s1440 = smul.addr %s1437, 8
          %s1441 = scalar_lea.hbm %s3, %s1440
          %s1442 = sshll.u32 %s1433, 4
          %s1443 = int_to_ptr.vmem [resolvable:$true] %s1442
          %s1444 = sshll.u32 %s1441, 4
          %s1445 = int_to_ptr.hbm [resolvable:$true] %s1444
          %1450 = dma.vmem_to_hbm [thread:$0]  %s1443, 256, %s1445, %s1430, 128, 128, 8
        $region48: #{tpu_custom_call.1} parent=31 // pred_fallthru
          _
      $region32: #{tpu_custom_call.1} parent=5 // pred_fallthru
        _
      %p1451 = scmp.le.s32.totalorder 2, %s16
      // Predicated region
      $region49: #{tpu_custom_call.1} parent=5 // pred_check
        %p1452 = pneg %p1451
      $region50: #{tpu_custom_call.1} parent=5 // pred_check_branch
        %1454 = sbr.rel (%p1452) target = $region52
      $region51: #{tpu_custom_call.1} parent=5 // pred_region
        %s1455 = ssub.s32 %s16, 2
        // Predicated region
        $region53: #{tpu_custom_call.1} parent=51 // pred_check
          %p1456 = pneg %p113
        $region54: #{tpu_custom_call.1} parent=51 // pred_check_branch
          %1458 = sbr.rel (%p1456) target = $region56
        $region55: #{tpu_custom_call.1} parent=51 // pred_region
          %s1459 = sand.u32 %s98, 1
          %s1460 = scalar_lea.sflag [#allocation4], %s1459
          %s1461 = sand.u32 %s98, 1
          %s1462 = smul.addr %s1461, 16
          %s1463 = scalar_lea.vmem [#allocation8], %s1462
          %1465 = dma.done %s1460, 256
        $region56: #{tpu_custom_call.1} parent=51 // pred_fallthru
          _
      $region52: #{tpu_custom_call.1} parent=5 // pred_fallthru
        _
    $region6: #{tpu_custom_call.1} parent=1 // loop_footer
      %s20 = sadd.s32 1, %s16
    $region7: #{tpu_custom_call.1} parent=1 // loop_footer_branch
      %15 = sbr.rel target = $region3
    $region8: #{tpu_custom_call.1} parent=1 // loop_exit
      _
    %1466 = vsyncpa [#allocation3], 1
    %s1467 = scalar_lea.sflag [#allocation3], 1
    %1468 = vsyncpa %s1467, 1
    %1469 = vsyncpa [#allocation6], 1
    %1470 = vsyncpa [#allocation4], 1
    %s1471 = scalar_lea.sflag [#allocation4], 1
    %1472 = vsyncpa %s1471, 1

</llo_original>
